<compile_context>
chip_gen: v5e
topology: v5e:2x2
jax: 0.10.0
libtpu: 0.0.40
codegen_flags: <defaults>
</compile_context>

<pallas_src>
import functools

import jax
import jax.numpy as jnp
from jax.experimental import pallas as pl
from jax.experimental.pallas import tpu as pltpu


# ----------------------------------------------------------------------------
# Kernels
# ----------------------------------------------------------------------------
def _dueling_kernel(x_ref, w1_ref, b1_ref, ws_ref, bs_ref, wq_ref, bq_ref, q_ref):
    # fc1 + relu  (bf16 MXU operands, f32 accumulate, f32 elementwise)
    h = jnp.dot(x_ref[...].astype(jnp.bfloat16), w1_ref[...],
                preferred_element_type=jnp.float32)
    h = jnp.maximum(h + b1_ref[...], 0.0)
    # fused value||advantage first layers + relu  -> (block_b, 512)
    h2 = jnp.dot(h.astype(jnp.bfloat16), ws_ref[...],
                 preferred_element_type=jnp.float32)
    h2 = jnp.maximum(h2 + bs_ref[...], 0.0)
    # fused heads + dueling combine (mean folded into W_q / b_q)
    q = jnp.dot(h2.astype(jnp.bfloat16), wq_ref[...],
                preferred_element_type=jnp.float32)
    q_ref[...] = q + bq_ref[...]


def _simple_kernel(x_ref, w1_ref, b1_ref, w2_ref, b2_ref, q_ref):
    # Non-dueling path: fc1 + relu, fc2.
    h = jnp.dot(x_ref[...].astype(jnp.bfloat16), w1_ref[...],
                preferred_element_type=jnp.float32)
    h = jnp.maximum(h + b1_ref[...], 0.0)
    q = jnp.dot(h.astype(jnp.bfloat16), w2_ref[...],
                preferred_element_type=jnp.float32)
    q_ref[...] = q + b2_ref[...]


# ----------------------------------------------------------------------------
# One-time parameter repacking (PyTorch (out,in) convention -> kernel layout)
# ----------------------------------------------------------------------------
def pack_dueling_params(params):
    """Repack dueling-DQN params once; do NOT call per forward pass."""
    w1 = jnp.asarray(params["fc1_w"], jnp.float32).T                  # (state_dim, hidden)
    b1 = jnp.asarray(params["fc1_b"], jnp.float32)[None, :]           # (1, hidden)

    # value||advantage first layers, concatenated along the output axis.
    ws = jnp.concatenate(
        [jnp.asarray(params["fc_value_w"], jnp.float32).T,
         jnp.asarray(params["fc_advantages_w"], jnp.float32).T], axis=1)  # (hidden, 512)
    bs = jnp.concatenate(
        [jnp.asarray(params["fc_value_b"], jnp.float32),
         jnp.asarray(params["fc_advantages_b"], jnp.float32)])[None, :]   # (1, 512)

    wv2 = jnp.asarray(params["value_w"], jnp.float32).T                   # (256, 1)
    bv2 = jnp.asarray(params["value_b"], jnp.float32)                     # (1,)
    wa2 = jnp.asarray(params["advantages_w"], jnp.float32).T              # (256, A)
    ba2 = jnp.asarray(params["advantages_b"], jnp.float32)                # (A,)
    action_dim = wa2.shape[1]

    # Fold the dueling combine into the head matmul (done in f32, then cast):
    #   Q = V + A - mean(A)  ==  [v, a] @ W_q + b_q
    wa2_c = wa2 - jnp.mean(wa2, axis=1, keepdims=True)
    ba2_c = ba2 - jnp.mean(ba2)
    wq = jnp.concatenate(
        [jnp.broadcast_to(wv2, (wv2.shape[0], action_dim)), wa2_c], axis=0)  # (512, A)
    bq = (bv2 + ba2_c)[None, :]                                              # (1, A)

    return dict(
        w1=w1.astype(jnp.bfloat16), b1=b1,
        ws=ws.astype(jnp.bfloat16), bs=bs,
        wq=wq.astype(jnp.bfloat16), bq=bq,
        action_dim=int(action_dim))


def pack_simple_params(params):
    """Repack non-dueling (fc1 -> fc2) params once."""
    w1 = jnp.asarray(params["fc1_w"], jnp.float32).T
    b1 = jnp.asarray(params["fc1_b"], jnp.float32)[None, :]
    w2 = jnp.asarray(params["fc2_w"], jnp.float32).T                  # (hidden, A)
    b2 = jnp.asarray(params["fc2_b"], jnp.float32)[None, :]           # (1, A)
    return dict(
        w1=w1.astype(jnp.bfloat16), b1=b1,
        w2=w2.astype(jnp.bfloat16), b2=b2,
        action_dim=int(w2.shape[1]))


# ----------------------------------------------------------------------------
# Forward wrappers (jitted; params are pre-packed)
# ----------------------------------------------------------------------------
def _weight_spec(arr):
    # Full-array block, same block index at every grid step -> stays VMEM-resident.
    return pl.BlockSpec(arr.shape, lambda i: (0, 0))


def _bytes(*arrs):
    return int(sum(a.size * a.dtype.itemsize for a in arrs))


@functools.partial(jax.jit, static_argnames=("block_b",))
def _dueling_forward(x, w1, b1, ws, bs, wq, bq, *, block_b):
    B, state_dim = x.shape
    hidden = w1.shape[1]
    shared = ws.shape[1]
    action_dim = wq.shape[1]
    grid = (pl.cdiv(B, block_b),)
    cost = pl.CostEstimate(
        flops=2 * B * (state_dim * hidden + hidden * shared + shared * action_dim),
        transcendentals=0,
        bytes_accessed=_bytes(x, w1, b1, ws, bs, wq, bq) + B * action_dim * 4)
    return pl.pallas_call(
        _dueling_kernel,
        out_shape=jax.ShapeDtypeStruct((B, action_dim), jnp.float32),
        grid=grid,
        in_specs=[
            pl.BlockSpec((block_b, state_dim), lambda i: (i, 0)),
            _weight_spec(w1), _weight_spec(b1),
            _weight_spec(ws), _weight_spec(bs),
            _weight_spec(wq), _weight_spec(bq),
        ],
        out_specs=pl.BlockSpec((block_b, action_dim), lambda i: (i, 0)),
        compiler_params=pltpu.CompilerParams(dimension_semantics=("parallel",)),
        cost_estimate=cost,
    )(x, w1, b1, ws, bs, wq, bq)


@functools.partial(jax.jit, static_argnames=("block_b",))
def _simple_forward(x, w1, b1, w2, b2, *, block_b):
    B, state_dim = x.shape
    hidden = w1.shape[1]
    action_dim = w2.shape[1]
    grid = (pl.cdiv(B, block_b),)
    cost = pl.CostEstimate(
        flops=2 * B * (state_dim * hidden + hidden * action_dim),
        transcendentals=0,
        bytes_accessed=_bytes(x, w1, b1, w2, b2) + B * action_dim * 4)
    return pl.pallas_call(
        _simple_kernel,
        out_shape=jax.ShapeDtypeStruct((B, action_dim), jnp.float32),
        grid=grid,
        in_specs=[
            pl.BlockSpec((block_b, state_dim), lambda i: (i, 0)),
            _weight_spec(w1), _weight_spec(b1),
            _weight_spec(w2), _weight_spec(b2),
        ],
        out_specs=pl.BlockSpec((block_b, action_dim), lambda i: (i, 0)),
        compiler_params=pltpu.CompilerParams(dimension_semantics=("parallel",)),
        cost_estimate=cost,
    )(x, w1, b1, w2, b2)


def _pick_block_b(B):
    """Generation-aware batch blocking.

    * B <= 16: one full-batch block (full dim satisfies layout rules).
    * otherwise: at least 2 grid steps so both v7x TensorCores get work via the
      "parallel" batch axis; block sized ~cdiv(B, n_blocks) rounded up to a
      multiple of 8 and capped at 512 (amortizes ~0.35us/step overhead on
      v5e/v6e; VMEM footprint at 512 rows is ~2 MiB, far under any gen's VMEM).
    """
    if B <= 16:
        return B
    n_blocks = max(2, pl.cdiv(B, 512))
    block_b = ((B + n_blocks - 1) // n_blocks + 7) // 8 * 8
    return min(block_b, 512)


def dqn_forward(x, packed, *, enable_dueling_dqn=True):
    """x: (B, state_dim) f32. packed: output of pack_*_params (one-time)."""
    block_b = _pick_block_b(x.shape[0])
    if enable_dueling_dqn:
        return _dueling_forward(
            x, packed["w1"], packed["b1"], packed["ws"], packed["bs"],
            packed["wq"], packed["bq"], block_b=block_b)
    return _simple_forward(
        x, packed["w1"], packed["b1"], packed["w2"], packed["b2"], block_b=block_b)


# ----------------------------------------------------------------------------
# Synthetic init (PyTorch-like uniform fan-in scaling) + pure-JAX reference
# ----------------------------------------------------------------------------
def init_params(key, state_dim, action_dim, hidden_dim=256, enable_dueling_dqn=True):
    def linear(key, in_f, out_f):
        kw, kb = jax.random.split(key)
        bound = 1.0 / (in_f ** 0.5)
        w = jax.random.uniform(kw, (out_f, in_f), jnp.float32, -bound, bound)
        b = jax.random.uniform(kb, (out_f,), jnp.float32, -bound, bound)
        return w, b

    keys = jax.random.split(key, 5)
    p = {}
    p["fc1_w"], p["fc1_b"] = linear(keys[0], state_dim, hidden_dim)
    if enable_dueling_dqn:
        p["fc_value_w"], p["fc_value_b"] = linear(keys[1], hidden_dim, 256)
        p["value_w"], p["value_b"] = linear(keys[2], 256, 1)
        p["fc_advantages_w"], p["fc_advantages_b"] = linear(keys[3], hidden_dim, 256)
        p["advantages_w"], p["advantages_b"] = linear(keys[4], 256, action_dim)
    else:
        p["fc2_w"], p["fc2_b"] = linear(keys[1], hidden_dim, action_dim)
    return p


def ref_forward(x, p, enable_dueling_dqn=True):
    h = jax.nn.relu(x @ p["fc1_w"].T + p["fc1_b"])
    if enable_dueling_dqn:
        v = jax.nn.relu(h @ p["fc_value_w"].T + p["fc_value_b"])
        V = v @ p["value_w"].T + p["value_b"]
        a = jax.nn.relu(h @ p["fc_advantages_w"].T + p["fc_advantages_b"])
        A = a @ p["advantages_w"].T + p["advantages_b"]
        return V + A - jnp.mean(A, axis=1, keepdims=True)
    return h @ p["fc2_w"].T + p["fc2_b"]


# ----------------------------------------------------------------------------
if __name__ == "__main__":
    key = jax.random.PRNGKey(0)
    k_x, k_p, k_p2, k_xl = jax.random.split(key, 4)

    B, state_dim, action_dim, hidden_dim = 8, 16, 8, 32
    x = jax.random.normal(k_x, (B, state_dim), jnp.float32)

    # bf16 MXU operands (f32 accumulate) -> loosen tolerance vs f32 reference.
    TOL = dict(atol=5e-2, rtol=5e-2)

    # --- dueling path (module default) ---
    params = init_params(k_p, state_dim, action_dim, hidden_dim, enable_dueling_dqn=True)
    packed = pack_dueling_params(params)            # one-time repack, outside the hot path
    q = dqn_forward(x, packed, enable_dueling_dqn=True)
    jax.block_until_ready(q)
    q_ref = ref_forward(x, params, enable_dueling_dqn=True)
    assert q.shape == (B, action_dim)
    assert jnp.allclose(q, q_ref, **TOL), float(jnp.max(jnp.abs(q - q_ref)))

    # --- dueling path, larger batch (exercises the multi-block parallel grid) ---
    x_l = jax.random.normal(k_xl, (64, state_dim), jnp.float32)
    q_l = dqn_forward(x_l, packed, enable_dueling_dqn=True)
    jax.block_until_ready(q_l)
    q_l_ref = ref_forward(x_l, params, enable_dueling_dqn=True)
    assert q_l.shape == (64, action_dim)
    assert jnp.allclose(q_l, q_l_ref, **TOL), float(jnp.max(jnp.abs(q_l - q_l_ref)))

    # --- non-dueling path ---
    params_nd = init_params(k_p2, state_dim, action_dim, hidden_dim, enable_dueling_dqn=False)
    packed_nd = pack_simple_params(params_nd)
    q_nd = dqn_forward(x, packed_nd, enable_dueling_dqn=False)
    jax.block_until_ready(q_nd)
    q_nd_ref = ref_forward(x, params_nd, enable_dueling_dqn=False)
    assert q_nd.shape == (B, action_dim)
    assert jnp.allclose(q_nd, q_nd_ref, **TOL)

    print("KERNEL_OK")
</pallas_src>

<mosaic_0001>
module attributes {stable_mosaic.version = 11 : i64} {
  func.func @_dueling_kernel(%arg0: i32, %arg1: memref<8x16xf32, #tpu.memory_space<vmem>>, %arg2: memref<16x32xbf16, #tpu.memory_space<vmem>>, %arg3: memref<1x32xf32, #tpu.memory_space<vmem>>, %arg4: memref<32x512xbf16, #tpu.memory_space<vmem>>, %arg5: memref<1x512xf32, #tpu.memory_space<vmem>>, %arg6: memref<512x8xbf16, #tpu.memory_space<vmem>>, %arg7: memref<1x8xf32, #tpu.memory_space<vmem>>, %arg8: memref<8x8xf32, #tpu.memory_space<vmem>>) attributes {dimension_semantics = [#tpu.dimension_semantics<parallel>], iteration_bounds = array<i64: 1>, scalar_prefetch = 0 : i64, scratch_operands = 0 : i64, tpu.core_type = #tpu.core_type<tc>, window_params = [{transform_indices = @transform_0, window_bounds = array<i64: 8, 16>}, {pipeline_mode = #tpu.pipeline_mode<synchronous>, transform_indices = @transform_1, window_bounds = array<i64: 16, 32>}, {pipeline_mode = #tpu.pipeline_mode<synchronous>, transform_indices = @transform_2, window_bounds = array<i64: 1, 32>}, {pipeline_mode = #tpu.pipeline_mode<synchronous>, transform_indices = @transform_3, window_bounds = array<i64: 32, 512>}, {pipeline_mode = #tpu.pipeline_mode<synchronous>, transform_indices = @transform_4, window_bounds = array<i64: 1, 512>}, {pipeline_mode = #tpu.pipeline_mode<synchronous>, transform_indices = @transform_5, window_bounds = array<i64: 512, 8>}, {pipeline_mode = #tpu.pipeline_mode<synchronous>, transform_indices = @transform_6, window_bounds = array<i64: 1, 8>}, {transform_indices = @transform_7, window_bounds = array<i64: 8, 8>}]} {
    %c0 = arith.constant 0 : index
    %c0_0 = arith.constant 0 : index
    %0 = vector.load %arg1[%c0, %c0_0] : memref<8x16xf32, #tpu.memory_space<vmem>>, vector<8x16xf32>
    %1 = arith.truncf %0 : vector<8x16xf32> to vector<8x16xbf16>
    %c0_1 = arith.constant 0 : index
    %c0_2 = arith.constant 0 : index
    %2 = vector.load %arg2[%c0_1, %c0_2] : memref<16x32xbf16, #tpu.memory_space<vmem>>, vector<16x32xbf16>
    %cst = arith.constant dense<0.000000e+00> : vector<8x32xf32>
    %3 = tpu.matmul %1, %2, %cst {dimension_numbers = #tpu.dot_dimension_numbers<[1], [0], [0], [1], [0, 0, 1, 1], [], []>} : vector<8x16xbf16>, vector<16x32xbf16>, vector<8x32xf32> -> vector<8x32xf32>
    %c0_3 = arith.constant 0 : index
    %c0_4 = arith.constant 0 : index
    %4 = vector.load %arg3[%c0_3, %c0_4] : memref<1x32xf32, #tpu.memory_space<vmem>>, vector<1x32xf32>
    %5 = vector.broadcast %4 : vector<1x32xf32> to vector<8x32xf32>
    %6 = arith.addf %3, %5 : vector<8x32xf32>
    %cst_5 = arith.constant 0.000000e+00 : f32
    %7 = vector.broadcast %cst_5 : f32 to vector<8x32xf32>
    %8 = arith.maximumf %6, %7 : vector<8x32xf32>
    %9 = arith.truncf %8 : vector<8x32xf32> to vector<8x32xbf16>
    %c0_6 = arith.constant 0 : index
    %c0_7 = arith.constant 0 : index
    %10 = vector.load %arg4[%c0_6, %c0_7] : memref<32x512xbf16, #tpu.memory_space<vmem>>, vector<32x512xbf16>
    %cst_8 = arith.constant dense<0.000000e+00> : vector<8x512xf32>
    %11 = tpu.matmul %9, %10, %cst_8 {dimension_numbers = #tpu.dot_dimension_numbers<[1], [0], [0], [1], [0, 0, 1, 1], [], []>} : vector<8x32xbf16>, vector<32x512xbf16>, vector<8x512xf32> -> vector<8x512xf32>
    %c0_9 = arith.constant 0 : index
    %c0_10 = arith.constant 0 : index
    %12 = vector.load %arg5[%c0_9, %c0_10] : memref<1x512xf32, #tpu.memory_space<vmem>>, vector<1x512xf32>
    %13 = vector.broadcast %12 : vector<1x512xf32> to vector<8x512xf32>
    %14 = arith.addf %11, %13 : vector<8x512xf32>
    %cst_11 = arith.constant 0.000000e+00 : f32
    %15 = vector.broadcast %cst_11 : f32 to vector<8x512xf32>
    %16 = arith.maximumf %14, %15 : vector<8x512xf32>
    %17 = arith.truncf %16 : vector<8x512xf32> to vector<8x512xbf16>
    %c0_12 = arith.constant 0 : index
    %c0_13 = arith.constant 0 : index
    %18 = vector.load %arg6[%c0_12, %c0_13] : memref<512x8xbf16, #tpu.memory_space<vmem>>, vector<512x8xbf16>
    %cst_14 = arith.constant dense<0.000000e+00> : vector<8x8xf32>
    %19 = tpu.matmul %17, %18, %cst_14 {dimension_numbers = #tpu.dot_dimension_numbers<[1], [0], [0], [1], [0, 0, 1, 1], [], []>} : vector<8x512xbf16>, vector<512x8xbf16>, vector<8x8xf32> -> vector<8x8xf32>
    %c0_15 = arith.constant 0 : index
    %c0_16 = arith.constant 0 : index
    %20 = vector.load %arg7[%c0_15, %c0_16] : memref<1x8xf32, #tpu.memory_space<vmem>>, vector<1x8xf32>
    %21 = vector.broadcast %20 : vector<1x8xf32> to vector<8x8xf32>
    %22 = arith.addf %19, %21 : vector<8x8xf32>
    %c0_17 = arith.constant 0 : index
    %c0_18 = arith.constant 0 : index
    %23 = vector.load %arg8[%c0_17, %c0_18] : memref<8x8xf32, #tpu.memory_space<vmem>>, vector<8x8xf32>
    tpu.vector_store %arg8[%c0_17, %c0_18], %22 {strides = array<i32>} : memref<8x8xf32, #tpu.memory_space<vmem>>, vector<8x8xf32>,
    return
  }
  func.func @transform_0(%arg0: i32) -> (i32, i32) {
    %c0_i32 = arith.constant 0 : i32
    %c0_i32_0 = arith.constant 0 : i32
    return %arg0, %c0_i32 : i32, i32
  }
  func.func @transform_1(%arg0: i32) -> (i32, i32) {
    %c0_i32 = arith.constant 0 : i32
    %c0_i32_0 = arith.constant 0 : i32
    %c0_i32_1 = arith.constant 0 : i32
    return %c0_i32, %c0_i32_0 : i32, i32
  }
  func.func @transform_2(%arg0: i32) -> (i32, i32) {
    %c0_i32 = arith.constant 0 : i32
    %c0_i32_0 = arith.constant 0 : i32
    %c0_i32_1 = arith.constant 0 : i32
    return %c0_i32, %c0_i32_0 : i32, i32
  }
  func.func @transform_3(%arg0: i32) -> (i32, i32) {
    %c0_i32 = arith.constant 0 : i32
    %c0_i32_0 = arith.constant 0 : i32
    %c0_i32_1 = arith.constant 0 : i32
    return %c0_i32, %c0_i32_0 : i32, i32
  }
  func.func @transform_4(%arg0: i32) -> (i32, i32) {
    %c0_i32 = arith.constant 0 : i32
    %c0_i32_0 = arith.constant 0 : i32
    %c0_i32_1 = arith.constant 0 : i32
    return %c0_i32, %c0_i32_0 : i32, i32
  }
  func.func @transform_5(%arg0: i32) -> (i32, i32) {
    %c0_i32 = arith.constant 0 : i32
    %c0_i32_0 = arith.constant 0 : i32
    %c0_i32_1 = arith.constant 0 : i32
    return %c0_i32, %c0_i32_0 : i32, i32
  }
  func.func @transform_6(%arg0: i32) -> (i32, i32) {
    %c0_i32 = arith.constant 0 : i32
    %c0_i32_0 = arith.constant 0 : i32
    %c0_i32_1 = arith.constant 0 : i32
    return %c0_i32, %c0_i32_0 : i32, i32
  }
  func.func @transform_7(%arg0: i32) -> (i32, i32) {
    %c0_i32 = arith.constant 0 : i32
    %c0_i32_0 = arith.constant 0 : i32
    return %arg0, %c0_i32 : i32, i32
  }
}

</mosaic_0001>

<llo_original>
// kernel: _dueling_forward.1
$region0: #{_dueling_forward.1}
  #allocation0 [shape = 'u32[]', space=smem, size = 0x4, offset = 0x4, fixed_abs, tag = 'smem constant byte address 0x4 - core index']
  #allocation1 [shape = 'u32[72,128]{1,0:T(1,128)}', space=vmem, size = 0x9000, scoped, tag = 'internal scratch']
  %s0 = inlined_call_operand.vmem [shape: f32[8,16], index: 0, kind: input, shape index: {}]
  %s1 = inlined_call_operand.vmem [shape: bf16[16,32], index: 1, kind: input, shape index: {}]
  %s2 = inlined_call_operand.vmem [shape: f32[1,32], index: 2, kind: input, shape index: {}]
  %s3 = inlined_call_operand.vmem [shape: bf16[32,512], index: 3, kind: input, shape index: {}]
  %s4 = inlined_call_operand.vmem [shape: f32[1,512], index: 4, kind: input, shape index: {}]
  %s5 = inlined_call_operand.vmem [shape: bf16[512,8], index: 5, kind: input, shape index: {}]
  %s6 = inlined_call_operand.vmem [shape: f32[1,8], index: 6, kind: input, shape index: {}]
  %s7 = inlined_call_operand.hbm [shape: f32[8,8], index: 7, kind: output, shape index: {}]
  %s8 = sld [smem:[#allocation0]]
  $region38: #{_dueling_forward.1} parent=0
    _
  %s10 = ssub.s32 1, %s8
  %s11 = scalar_select 0, %s10, %s8
  $region1: #{_dueling_forward.1} parent=0
    #allocation2 [shape = 'u8[4096]{0}', space=vmem, size = 0x1000, scoped, tag = 'output window, operand 0, single buffered']
    #allocation3 [shape = 's32[1]{0}', space=sflag, size = 0x4, scoped, tag = 'scoped memory for _dueling_forward.1']
    %12 = vsyncpa [#allocation3], 0
    // Predicated region
    $region2: #{_dueling_forward.1} parent=1 // pred_check
      _
    $region3: #{_dueling_forward.1} parent=1 // pred_check_branch
      %14 = sbr.rel (0) target = $region5
    $region4: #{_dueling_forward.1} parent=1 // pred_region
      _
    $region5: #{_dueling_forward.1} parent=1 // pred_fallthru
      _
    // Predicated region
    $region6: #{_dueling_forward.1} parent=1 // pred_check
      _
    $region7: #{_dueling_forward.1} parent=1 // pred_check_branch
      %16 = sbr.rel (0) target = $region9
    $region8: #{_dueling_forward.1} parent=1 // pred_region
      _
    $region9: #{_dueling_forward.1} parent=1 // pred_fallthru
      _
    // Predicated region
    $region10: #{_dueling_forward.1} parent=1 // pred_check
      _
    $region11: #{_dueling_forward.1} parent=1 // pred_check_branch
      %18 = sbr.rel (0) target = $region13
    $region12: #{_dueling_forward.1} parent=1 // pred_region
      _
    $region13: #{_dueling_forward.1} parent=1 // pred_fallthru
      _
    // Predicated region
    $region14: #{_dueling_forward.1} parent=1 // pred_check
      _
    $region15: #{_dueling_forward.1} parent=1 // pred_check_branch
      %20 = sbr.rel (0) target = $region17
    $region16: #{_dueling_forward.1} parent=1 // pred_region
      _
    $region17: #{_dueling_forward.1} parent=1 // pred_fallthru
      _
    // Predicated region
    $region18: #{_dueling_forward.1} parent=1 // pred_check
      _
    $region19: #{_dueling_forward.1} parent=1 // pred_check_branch
      %22 = sbr.rel (0) target = $region21
    $region20: #{_dueling_forward.1} parent=1 // pred_region
      _
    $region21: #{_dueling_forward.1} parent=1 // pred_fallthru
      _
    // Predicated region
    $region22: #{_dueling_forward.1} parent=1 // pred_check
      _
    $region23: #{_dueling_forward.1} parent=1 // pred_check_branch
      %24 = sbr.rel (0) target = $region25
    $region24: #{_dueling_forward.1} parent=1 // pred_region
      _
    $region25: #{_dueling_forward.1} parent=1 // pred_fallthru
      _
    // Predicated region
    $region26: #{_dueling_forward.1} parent=1 // pred_check
      _
    $region27: #{_dueling_forward.1} parent=1 // pred_check_branch
      %26 = sbr.rel (0) target = $region29
    $region28: #{_dueling_forward.1} parent=1 // pred_region
      _
    $region29: #{_dueling_forward.1} parent=1 // pred_fallthru
      _
    %v28 = vld [vmem:[%s0] sm:$0xff]
    %v29 = vpack.c.bf16 %v28, %v28
    %v30 = vld [vmem:[%s1] sm:$0xf]
    %v31 = vld [vmem:[%s1 + $0x4] sm:$0xf]
    %v32 = vld [vmem:[%s2] sm:$0x1]
    %v34 = vperm.slane %v32, 0
    %v38 = vunpack.c.l.b16 %v30
    %v39 = vunpack.c.l.b16 %v31
    %v40 = vpack.c.b16 %v39, %v38
    %vm42 = vcmask 130048
    %v44 = vsel %vm42, %v29, 0
    %46 = vmatpush.bf16.msra.mxu0 0
    %47 = vmatpush.bf16.msra.mxu0 0
    %48 = vmatpush.bf16.msra.mxu0 0
    %49 = vmatpush.bf16.msra.mxu0 0
    %50 = vmatpush.bf16.msra.mxu0 0
    %51 = vmatpush.bf16.msra.mxu0 0
    %52 = vmatpush.bf16.msra.mxu0 0
    %53 = vmatpush.bf16.msra.mxu0 %v40
    %54 = vmatmul.bf16.gmra.mxu0 %v44
    %v55 = vpop.f32.mrf.mxu0
    %v56 = vadd.f32 %v34, %v55
    %v57 = vpop.f32.mrf.mxu0
    %58 = vdwg.mxu0
    %v59 = vmax.f32 %v56, 0.0
    %v60 = vpack.c.bf16 %v59, %v59
    %v61 = vld [vmem:[%s3] sm:$0xff]
    %v62 = vld [vmem:[%s3 + $0x8] sm:$0xff]
    %v63 = vld [vmem:[%s3 + $0x10] sm:$0xff]
    %v64 = vld [vmem:[%s3 + $0x18] sm:$0xff]
    %v65 = vld [vmem:[%s3 + $0x20] sm:$0xff]
    %v66 = vld [vmem:[%s3 + $0x28] sm:$0xff]
    %v67 = vld [vmem:[%s3 + $0x30] sm:$0xff]
    %v68 = vld [vmem:[%s3 + $0x38] sm:$0xff]
    %v69 = vld [vmem:[%s4] sm:$0xf]
    %v71 = vperm.slane %v69, 0
    %v72 = vperm.slane %v69, 1
    %v73 = vperm.slane %v69, 2
    %v74 = vperm.slane %v69, 3
    %v87 = vunpack.c.l.b16 %v61
    %v88 = vunpack.c.h.b16 %v61
    %v89 = vunpack.c.l.b16 %v62
    %v90 = vunpack.c.h.b16 %v62
    %v91 = vunpack.c.l.b16 %v63
    %v92 = vunpack.c.h.b16 %v63
    %v93 = vunpack.c.l.b16 %v64
    %v94 = vunpack.c.h.b16 %v64
    %v95 = vunpack.c.l.b16 %v65
    %v96 = vunpack.c.h.b16 %v65
    %v97 = vunpack.c.l.b16 %v66
    %v98 = vunpack.c.h.b16 %v66
    %v99 = vunpack.c.l.b16 %v67
    %v100 = vunpack.c.h.b16 %v67
    %v101 = vunpack.c.l.b16 %v68
    %v102 = vunpack.c.h.b16 %v68
    %v103 = vpack.c.b16 %v91, %v87
    %v104 = vpack.c.b16 %v92, %v88
    %v105 = vpack.c.b16 %v93, %v89
    %v106 = vpack.c.b16 %v94, %v90
    %v107 = vpack.c.b16 %v99, %v95
    %v108 = vpack.c.b16 %v100, %v96
    %v109 = vpack.c.b16 %v101, %v97
    %v110 = vpack.c.b16 %v102, %v98
    %vm119 = vcmask 261120
    %v121 = vsel %vm119, %v60, 0
    %123 = vmatpush.bf16.msra.mxu0 0
    %124 = vmatpush.bf16.msra.mxu0 0
    %125 = vmatpush.bf16.msra.mxu0 0
    %126 = vmatpush.bf16.msra.mxu0 0
    %127 = vmatpush.bf16.msra.mxu0 0
    %128 = vmatpush.bf16.msra.mxu0 0
    %129 = vmatpush.bf16.msra.mxu0 %v107
    %130 = vmatpush.bf16.msra.mxu0 %v103
    %131 = vmatmul.bf16.gmra.mxu0 %v121
    %v132 = vpop.f32.mrf.mxu0
    %v133 = vadd.f32 %v71, %v132
    %v134 = vpop.f32.mrf.mxu0
    %135 = vdwg.mxu0
    %136 = vmatpush.bf16.msra.mxu0 0
    %137 = vmatpush.bf16.msra.mxu0 0
    %138 = vmatpush.bf16.msra.mxu0 0
    %139 = vmatpush.bf16.msra.mxu0 0
    %140 = vmatpush.bf16.msra.mxu0 0
    %141 = vmatpush.bf16.msra.mxu0 0
    %142 = vmatpush.bf16.msra.mxu0 %v108
    %143 = vmatpush.bf16.msra.mxu0 %v104
    %144 = vmatmul.bf16.gmra.mxu0 %v121
    %v145 = vpop.f32.mrf.mxu0
    %v146 = vadd.f32 %v72, %v145
    %v147 = vpop.f32.mrf.mxu0
    %148 = vdwg.mxu0
    %149 = vmatpush.bf16.msra.mxu0 0
    %150 = vmatpush.bf16.msra.mxu0 0
    %151 = vmatpush.bf16.msra.mxu0 0
    %152 = vmatpush.bf16.msra.mxu0 0
    %153 = vmatpush.bf16.msra.mxu0 0
    %154 = vmatpush.bf16.msra.mxu0 0
    %155 = vmatpush.bf16.msra.mxu0 %v109
    %156 = vmatpush.bf16.msra.mxu0 %v105
    %157 = vmatmul.bf16.gmra.mxu0 %v121
    %v158 = vpop.f32.mrf.mxu0
    %v159 = vadd.f32 %v73, %v158
    %v160 = vpop.f32.mrf.mxu0
    %161 = vdwg.mxu0
    %162 = vmatpush.bf16.msra.mxu0 0
    %163 = vmatpush.bf16.msra.mxu0 0
    %164 = vmatpush.bf16.msra.mxu0 0
    %165 = vmatpush.bf16.msra.mxu0 0
    %166 = vmatpush.bf16.msra.mxu0 0
    %167 = vmatpush.bf16.msra.mxu0 0
    %168 = vmatpush.bf16.msra.mxu0 %v110
    %169 = vmatpush.bf16.msra.mxu0 %v106
    %170 = vmatmul.bf16.gmra.mxu0 %v121
    %v171 = vpop.f32.mrf.mxu0
    %v172 = vadd.f32 %v74, %v171
    %v173 = vpop.f32.mrf.mxu0
    %174 = vdwg.mxu0
    %v175 = vmax.f32 %v133, 0.0
    %v176 = vmax.f32 %v146, 0.0
    %v177 = vmax.f32 %v159, 0.0
    %v178 = vmax.f32 %v172, 0.0
    %v179 = vpack.c.bf16 %v175, %v175
    %v180 = vpack.c.bf16 %v176, %v176
    %v181 = vpack.c.bf16 %v177, %v177
    %v182 = vpack.c.bf16 %v178, %v178
    %v183 = vld [vmem:[%s5] sm:$0xf]
    %v184 = vld [vmem:[%s5 + $0x4] sm:$0xf]
    %v185 = vld [vmem:[%s5 + $0x8] sm:$0xf]
    %v186 = vld [vmem:[%s5 + $0xc] sm:$0xf]
    %v187 = vld [vmem:[%s5 + $0x10] sm:$0xf]
    %v188 = vld [vmem:[%s5 + $0x14] sm:$0xf]
    %v189 = vld [vmem:[%s5 + $0x18] sm:$0xf]
    %v190 = vld [vmem:[%s5 + $0x1c] sm:$0xf]
    %v191 = vld [vmem:[%s5 + $0x20] sm:$0xf]
    %v192 = vld [vmem:[%s5 + $0x24] sm:$0xf]
    %v193 = vld [vmem:[%s5 + $0x28] sm:$0xf]
    %v194 = vld [vmem:[%s5 + $0x2c] sm:$0xf]
    %v195 = vld [vmem:[%s5 + $0x30] sm:$0xf]
    %v196 = vld [vmem:[%s5 + $0x34] sm:$0xf]
    %v197 = vld [vmem:[%s5 + $0x38] sm:$0xf]
    %v198 = vld [vmem:[%s5 + $0x3c] sm:$0xf]
    %v199 = vld [vmem:[%s5 + $0x40] sm:$0xf]
    %v200 = vld [vmem:[%s5 + $0x44] sm:$0xf]
    %v201 = vld [vmem:[%s5 + $0x48] sm:$0xf]
    %v202 = vld [vmem:[%s5 + $0x4c] sm:$0xf]
    %v203 = vld [vmem:[%s5 + $0x50] sm:$0xf]
    %v204 = vld [vmem:[%s5 + $0x54] sm:$0xf]
    %v205 = vld [vmem:[%s5 + $0x58] sm:$0xf]
    %v206 = vld [vmem:[%s5 + $0x5c] sm:$0xf]
    %v207 = vld [vmem:[%s5 + $0x60] sm:$0xf]
    %v208 = vld [vmem:[%s5 + $0x64] sm:$0xf]
    %v209 = vld [vmem:[%s5 + $0x68] sm:$0xf]
    %v210 = vld [vmem:[%s5 + $0x6c] sm:$0xf]
    %v211 = vld [vmem:[%s5 + $0x70] sm:$0xf]
    %v212 = vld [vmem:[%s5 + $0x74] sm:$0xf]
    %v213 = vld [vmem:[%s5 + $0x78] sm:$0xf]
    %v214 = vld [vmem:[%s5 + $0x7c] sm:$0xf]
    %v215 = vld [vmem:[%s5 + $0x80] sm:$0xf]
    %v216 = vld [vmem:[%s5 + $0x84] sm:$0xf]
    %v217 = vld [vmem:[%s5 + $0x88] sm:$0xf]
    %v218 = vld [vmem:[%s5 + $0x8c] sm:$0xf]
    %v219 = vld [vmem:[%s5 + $0x90] sm:$0xf]
    %v220 = vld [vmem:[%s5 + $0x94] sm:$0xf]
    %v221 = vld [vmem:[%s5 + $0x98] sm:$0xf]
    %v222 = vld [vmem:[%s5 + $0x9c] sm:$0xf]
    %v223 = vld [vmem:[%s5 + $0xa0] sm:$0xf]
    %v224 = vld [vmem:[%s5 + $0xa4] sm:$0xf]
    %v225 = vld [vmem:[%s5 + $0xa8] sm:$0xf]
    %v226 = vld [vmem:[%s5 + $0xac] sm:$0xf]
    %v227 = vld [vmem:[%s5 + $0xb0] sm:$0xf]
    %v228 = vld [vmem:[%s5 + $0xb4] sm:$0xf]
    %v229 = vld [vmem:[%s5 + $0xb8] sm:$0xf]
    %v230 = vld [vmem:[%s5 + $0xbc] sm:$0xf]
    %v231 = vld [vmem:[%s5 + $0xc0] sm:$0xf]
    %v232 = vld [vmem:[%s5 + $0xc4] sm:$0xf]
    %v233 = vld [vmem:[%s5 + $0xc8] sm:$0xf]
    %v234 = vld [vmem:[%s5 + $0xcc] sm:$0xf]
    %v235 = vld [vmem:[%s5 + $0xd0] sm:$0xf]
    %v236 = vld [vmem:[%s5 + $0xd4] sm:$0xf]
    %v237 = vld [vmem:[%s5 + $0xd8] sm:$0xf]
    %v238 = vld [vmem:[%s5 + $0xdc] sm:$0xf]
    %v239 = vld [vmem:[%s5 + $0xe0] sm:$0xf]
    %v240 = vld [vmem:[%s5 + $0xe4] sm:$0xf]
    %v241 = vld [vmem:[%s5 + $0xe8] sm:$0xf]
    %v242 = vld [vmem:[%s5 + $0xec] sm:$0xf]
    %v243 = vld [vmem:[%s5 + $0xf0] sm:$0xf]
    %v244 = vld [vmem:[%s5 + $0xf4] sm:$0xf]
    %v245 = vld [vmem:[%s5 + $0xf8] sm:$0xf]
    %v246 = vld [vmem:[%s5 + $0xfc] sm:$0xf]
    %v247 = vld [vmem:[%s6] sm:$0x1]
    %v249 = vperm.slane %v247, 0
    %v315 = vunpack.c.l.b16 %v183
    %v316 = vunpack.c.l.b16 %v184
    %v317 = vunpack.c.l.b16 %v185
    %v318 = vunpack.c.l.b16 %v186
    %v319 = vunpack.c.l.b16 %v187
    %v320 = vunpack.c.l.b16 %v188
    %v321 = vunpack.c.l.b16 %v189
    %v322 = vunpack.c.l.b16 %v190
    %v323 = vunpack.c.l.b16 %v191
    %v324 = vunpack.c.l.b16 %v192
    %v325 = vunpack.c.l.b16 %v193
    %v326 = vunpack.c.l.b16 %v194
    %v327 = vunpack.c.l.b16 %v195
    %v328 = vunpack.c.l.b16 %v196
    %v329 = vunpack.c.l.b16 %v197
    %v330 = vunpack.c.l.b16 %v198
    %v331 = vunpack.c.l.b16 %v199
    %v332 = vunpack.c.l.b16 %v200
    %v333 = vunpack.c.l.b16 %v201
    %v334 = vunpack.c.l.b16 %v202
    %v335 = vunpack.c.l.b16 %v203
    %v336 = vunpack.c.l.b16 %v204
    %v337 = vunpack.c.l.b16 %v205
    %v338 = vunpack.c.l.b16 %v206
    %v339 = vunpack.c.l.b16 %v207
    %v340 = vunpack.c.l.b16 %v208
    %v341 = vunpack.c.l.b16 %v209
    %v342 = vunpack.c.l.b16 %v210
    %v343 = vunpack.c.l.b16 %v211
    %v344 = vunpack.c.l.b16 %v212
    %v345 = vunpack.c.l.b16 %v213
    %v346 = vunpack.c.l.b16 %v214
    %v347 = vunpack.c.l.b16 %v215
    %v348 = vunpack.c.l.b16 %v216
    %v349 = vunpack.c.l.b16 %v217
    %v350 = vunpack.c.l.b16 %v218
    %v351 = vunpack.c.l.b16 %v219
    %v352 = vunpack.c.l.b16 %v220
    %v353 = vunpack.c.l.b16 %v221
    %v354 = vunpack.c.l.b16 %v222
    %v355 = vunpack.c.l.b16 %v223
    %v356 = vunpack.c.l.b16 %v224
    %v357 = vunpack.c.l.b16 %v225
    %v358 = vunpack.c.l.b16 %v226
    %v359 = vunpack.c.l.b16 %v227
    %v360 = vunpack.c.l.b16 %v228
    %v361 = vunpack.c.l.b16 %v229
    %v362 = vunpack.c.l.b16 %v230
    %v363 = vunpack.c.l.b16 %v231
    %v364 = vunpack.c.l.b16 %v232
    %v365 = vunpack.c.l.b16 %v233
    %v366 = vunpack.c.l.b16 %v234
    %v367 = vunpack.c.l.b16 %v235
    %v368 = vunpack.c.l.b16 %v236
    %v369 = vunpack.c.l.b16 %v237
    %v370 = vunpack.c.l.b16 %v238
    %v371 = vunpack.c.l.b16 %v239
    %v372 = vunpack.c.l.b16 %v240
    %v373 = vunpack.c.l.b16 %v241
    %v374 = vunpack.c.l.b16 %v242
    %v375 = vunpack.c.l.b16 %v243
    %v376 = vunpack.c.l.b16 %v244
    %v377 = vunpack.c.l.b16 %v245
    %v378 = vunpack.c.l.b16 %v246
    %v379 = vpack.c.b16 %v316, %v315
    %v380 = vpack.c.b16 %v318, %v317
    %v381 = vpack.c.b16 %v320, %v319
    %v382 = vpack.c.b16 %v322, %v321
    %v383 = vpack.c.b16 %v324, %v323
    %v384 = vpack.c.b16 %v326, %v325
    %v385 = vpack.c.b16 %v328, %v327
    %v386 = vpack.c.b16 %v330, %v329
    %v387 = vpack.c.b16 %v332, %v331
    %v388 = vpack.c.b16 %v334, %v333
    %v389 = vpack.c.b16 %v336, %v335
    %v390 = vpack.c.b16 %v338, %v337
    %v391 = vpack.c.b16 %v340, %v339
    %v392 = vpack.c.b16 %v342, %v341
    %v393 = vpack.c.b16 %v344, %v343
    %v394 = vpack.c.b16 %v346, %v345
    %v395 = vpack.c.b16 %v348, %v347
    %v396 = vpack.c.b16 %v350, %v349
    %v397 = vpack.c.b16 %v352, %v351
    %v398 = vpack.c.b16 %v354, %v353
    %v399 = vpack.c.b16 %v356, %v355
    %v400 = vpack.c.b16 %v358, %v357
    %v401 = vpack.c.b16 %v360, %v359
    %v402 = vpack.c.b16 %v362, %v361
    %v403 = vpack.c.b16 %v364, %v363
    %v404 = vpack.c.b16 %v366, %v365
    %v405 = vpack.c.b16 %v368, %v367
    %v406 = vpack.c.b16 %v370, %v369
    %v407 = vpack.c.b16 %v372, %v371
    %v408 = vpack.c.b16 %v374, %v373
    %v409 = vpack.c.b16 %v376, %v375
    %v410 = vpack.c.b16 %v378, %v377
    %443 = vmatpush.bf16.msra.mxu0 %v386
    %444 = vmatpush.bf16.msra.mxu0 %v385
    %445 = vmatpush.bf16.msra.mxu0 %v384
    %446 = vmatpush.bf16.msra.mxu0 %v383
    %447 = vmatpush.bf16.msra.mxu0 %v382
    %448 = vmatpush.bf16.msra.mxu0 %v381
    %449 = vmatpush.bf16.msra.mxu0 %v380
    %450 = vmatpush.bf16.msra.mxu0 %v379
    %451 = vmatmul.bf16.gmra.mxu0 %v179
    %v452 = vpop.f32.mrf.mxu0
    %v453 = vadd.f32 %v249, %v452
    %v454 = vpop.f32.mrf.mxu0
    %455 = vdwg.mxu0
    %456 = vmatpush.bf16.msra.mxu0 %v394
    %457 = vmatpush.bf16.msra.mxu0 %v393
    %458 = vmatpush.bf16.msra.mxu0 %v392
    %459 = vmatpush.bf16.msra.mxu0 %v391
    %460 = vmatpush.bf16.msra.mxu0 %v390
    %461 = vmatpush.bf16.msra.mxu0 %v389
    %462 = vmatpush.bf16.msra.mxu0 %v388
    %463 = vmatpush.bf16.msra.mxu0 %v387
    %464 = vmatmul.bf16.gmra.mxu0 %v180
    %v465 = vpop.f32.mrf.mxu0
    %v466 = vadd.f32 %v453, %v465
    %v467 = vpop.f32.mrf.mxu0
    %468 = vdwg.mxu0
    %469 = vmatpush.bf16.msra.mxu0 %v402
    %470 = vmatpush.bf16.msra.mxu0 %v401
    %471 = vmatpush.bf16.msra.mxu0 %v400
    %472 = vmatpush.bf16.msra.mxu0 %v399
    %473 = vmatpush.bf16.msra.mxu0 %v398
    %474 = vmatpush.bf16.msra.mxu0 %v397
    %475 = vmatpush.bf16.msra.mxu0 %v396
    %476 = vmatpush.bf16.msra.mxu0 %v395
    %477 = vmatmul.bf16.gmra.mxu0 %v181
    %v478 = vpop.f32.mrf.mxu0
    %v479 = vadd.f32 %v466, %v478
    %v480 = vpop.f32.mrf.mxu0
    %481 = vdwg.mxu0
    %482 = vmatpush.bf16.msra.mxu0 %v410
    %483 = vmatpush.bf16.msra.mxu0 %v409
    %484 = vmatpush.bf16.msra.mxu0 %v408
    %485 = vmatpush.bf16.msra.mxu0 %v407
    %486 = vmatpush.bf16.msra.mxu0 %v406
    %487 = vmatpush.bf16.msra.mxu0 %v405
    %488 = vmatpush.bf16.msra.mxu0 %v404
    %489 = vmatpush.bf16.msra.mxu0 %v403
    %490 = vmatmul.bf16.gmra.mxu0 %v182
    %v491 = vpop.f32.mrf.mxu0
    %v492 = vadd.f32 %v479, %v491
    %v493 = vpop.f32.mrf.mxu0
    %494 = vdwg.mxu0
    %vm495 = vcmask 64512
    %496 = vst.msk [vmem:[#allocation2] sm:$0xff] %vm495, %v492
    // Predicated region
    $region30: #{_dueling_forward.1} parent=1 // pred_check
      _
    $region31: #{_dueling_forward.1} parent=1 // pred_check_branch
      %498 = sbr.rel (0) target = $region33
    $region32: #{_dueling_forward.1} parent=1 // pred_region
      %500 = vsyncadd [#allocation3], 0
      %s502 = sshll.u32 [#allocation2], 4
      %s503 = int_to_ptr.vmem [resolvable:$true] %s502
      %s504 = sshll.u32 %s7, 4
      %s505 = int_to_ptr.hbm [resolvable:$true] %s504
      %507 = dma.vmem_to_hbm [thread:$0]  %s503, 128, %s505, [#allocation3]
    $region33: #{_dueling_forward.1} parent=1 // pred_fallthru
      _
    // Predicated region
    $region34: #{_dueling_forward.1} parent=1 // pred_check
      _
    $region35: #{_dueling_forward.1} parent=1 // pred_check_branch
      %509 = sbr.rel (0) target = $region37
    $region36: #{_dueling_forward.1} parent=1 // pred_region
      %511 = dma.done [#allocation3], 128
    $region37: #{_dueling_forward.1} parent=1 // pred_fallthru
      _
    %512 = vsyncpa [#allocation3], 1

</llo_original>
